<compile_context>
chip_gen: v7x
topology: tpu7x:2x2x1
jax: 0.10.0
libtpu: 0.0.40
codegen_flags: <defaults>
</compile_context>

<pallas_src>
import jax
import jax.numpy as jnp
from jax import lax
from jax.experimental import pallas as pl
from jax.experimental.pallas import tpu as pltpu

PRIMITIVES = ["conv_3x3", "conv_1x1", "skip_connect"]

_LANE = 128


def _kernel_size(prim):
    # "conv_3x3" -> 3, "conv_1x1" -> 1
    return int(prim.split("_")[1].split("x")[0])


def _round_up(x, m):
    return (x + m - 1) // m * m


def _vmem_capacity_bytes():
    """Physical VMEM of the current TPU generation (conservative fallback)."""
    try:
        return int(pltpu.get_tpu_info().vmem_capacity_bytes)
    except Exception:
        return 64 << 20  # v7x per-TC VMEM; safe lower bound for all generations


def _choose_m_tile(M, k_pad, cout_pad, vmem_cap):
    """Largest row tile whose double-buffered working set fits ~1/3 of VMEM."""
    budget = max(vmem_cap // 3, 4 << 20)
    per_row = 2 * 2 * (k_pad + cout_pad)          # double-buffered bf16 input + output rows
    m_tile = min(budget // per_row, 4096, _round_up(M, 8))
    m_tile = max(8, (m_tile // 8) * 8)            # keep the (8, 128) block rule satisfied
    return int(m_tile)


def _vmem_limit_bytes(m_tile, k_pad, cout_pad, vmem_cap):
    need = (2 * m_tile * k_pad * 2        # double-buffered bf16 input tile
            + 2 * m_tile * cout_pad * 2   # double-buffered bf16 output tile
            + 2 * k_pad * cout_pad * 2)   # (double-buffered) resident weight
    return int(min(max(need + (4 << 20), 16 << 20), int(0.8 * vmem_cap)))


def _mixed_matmul_kernel(x_ref, w_ref, o_ref):
    """One grid step: a single fused MXU matmul over an im2col row tile.

    x_ref : (m_tile, K_pad)   bf16   im2col'd input rows (9 taps folded into K)
    w_ref : (K_pad, Cout_pad) bf16   gate-folded effective weight (resident)
    o_ref : (m_tile, Cout_pad) bf16  output rows
    """
    o_ref[...] = jnp.dot(
        x_ref[...], w_ref[...], preferred_element_type=jnp.float32
    ).astype(o_ref.dtype)


@jax.jit
def _mixed_op_forward(x_nchw, w_eff):
    """Apply the gate-folded effective 3x3 conv with the Pallas kernel. NCHW in/out."""
    N, C_in, H, W = x_nchw.shape
    C_out = w_eff.shape[-1]
    K = 9 * C_in
    k_pad = _round_up(K, _LANE)
    cout_pad = _round_up(C_out, _LANE)

    # NCHW -> NHWC bf16, zero halo pad, im2col the 3x3 taps into the lane (K) dim.
    x = jnp.transpose(x_nchw, (0, 2, 3, 1)).astype(jnp.bfloat16)
    xp = jnp.pad(x, ((0, 0), (1, 1), (1, 1), (0, 0)))
    cols = jnp.concatenate(
        [xp[:, kh:kh + H, kw:kw + W, :] for kh in range(3) for kw in range(3)],
        axis=-1)                                         # (N, H, W, 9*C_in)
    M = N * H * W
    cols = cols.reshape(M, K)
    cols = jnp.pad(cols, ((0, 0), (0, k_pad - K)))

    vmem_cap = _vmem_capacity_bytes()
    m_tile = _choose_m_tile(M, k_pad, cout_pad, vmem_cap)
    m_pad = _round_up(M, m_tile)
    cols = jnp.pad(cols, ((0, m_pad - M), (0, 0)))       # pad rows -> no divisor cliff

    # Fold the (3,3,Cin,Cout) effective weight into the matching (K, Cout) matrix.
    w_mat = w_eff.reshape(K, C_out)
    w_mat = jnp.pad(w_mat, ((0, k_pad - K), (0, cout_pad - C_out))).astype(jnp.bfloat16)

    out = pl.pallas_call(
        _mixed_matmul_kernel,
        out_shape=jax.ShapeDtypeStruct((m_pad, cout_pad), jnp.bfloat16),
        grid_spec=pltpu.PrefetchScalarGridSpec(
            num_scalar_prefetch=0,
            grid=(m_pad // m_tile,),
            in_specs=[
                pl.BlockSpec((m_tile, k_pad), lambda i: (i, 0)),
                # Folded weight: one full VMEM block with a constant index map.
                pl.BlockSpec((k_pad, cout_pad), lambda i: (0, 0)),
            ],
            out_specs=pl.BlockSpec((m_tile, cout_pad), lambda i: (i, 0)),
        ),
        compiler_params=pltpu.CompilerParams(
            dimension_semantics=("parallel",),
            vmem_limit_bytes=_vmem_limit_bytes(m_tile, k_pad, cout_pad, vmem_cap),
        ),
    )(cols, w_mat)

    # Drop row/channel padding, back to f32 NCHW.
    # TODO(synk): for tiny C_out the padded-lane writeback is still amplified; a
    # (W, C_out)-packed lane layout would shrink it further at the cost of in-kernel
    # lane shuffles.
    out = out[:M, :C_out].astype(jnp.float32).reshape(N, H, W, C_out)
    return jnp.transpose(out, (0, 3, 1, 2))


class MixedOp:
    """JAX/Pallas port of the PyTorch MixedOp forward pass."""

    def __init__(self, C_in, C_out, stride, key):
        # TODO(synk): stride > 1 path (strided convs / factorized-reduce skip) not
        # implemented in this synthetic kernel; demo uses stride == 1.
        assert stride == 1, "this Pallas demo implements the stride=1 path"
        self.C_in, self.C_out, self.stride = C_in, C_out, stride

        self.candidate = list(PRIMITIVES)
        if stride == 1 and C_in == C_out:
            self.candidate = PRIMITIVES + ["zero"]
        self.n_choices = len(self.candidate)

        keys = jax.random.split(key, self.n_choices + 2)
        self.weights = {}
        for i, prim in enumerate(self.candidate):
            if prim.startswith("conv"):
                k = _kernel_size(prim)
                self.weights[prim] = 0.1 * jax.random.normal(
                    keys[i], (k, k, C_in, C_out), jnp.float32)

        # Architecture parameters (deterministic stand-in for torch.Tensor init).
        self.alpha = jax.random.normal(keys[-2], (self.n_choices,), jnp.float32)
        self.path_gate = jax.random.normal(keys[-1], (self.n_choices,), jnp.float32)

        # Deterministic replacement for binarize()'s torch.multinomial sampling:
        # behave like set_chosen_op_active() -> chosen = argmax(alpha).
        # (Construction-time only; pulled to host explicitly so it never lands
        #  inside a traced/jitted computation.)
        chosen = int(jax.device_get(jnp.argmax(self.alpha)))
        self.active_index = [chosen]
        self.inactive_index = [i for i in range(self.n_choices) if i != chosen]

    def _folded_weight(self):
        """Fold every involved (gate-weighted) linear candidate into one 3x3 HWIO weight."""
        w = jnp.zeros((3, 3, self.C_in, self.C_out), jnp.float32)
        for i in self.active_index + self.inactive_index:
            prim = self.candidate[i]
            g = self.path_gate[i]
            if prim == "zero":
                continue                                    # contributes g * 0
            if prim == "skip_connect":
                # TODO(synk): real repo uses a conv shortcut when C_in != C_out.
                w = w.at[1, 1].add(g * jnp.eye(self.C_in, self.C_out, dtype=jnp.float32))
            elif prim == "conv_3x3":
                w = w + g * self.weights[prim]
            elif prim == "conv_1x1":
                w = w.at[1, 1].add(g * self.weights[prim][0, 0])
        return w

    def __call__(self, x_nchw):
        return _mixed_op_forward(x_nchw.astype(jnp.float32), self._folded_weight())


def _reference_forward(m, x_nchw):
    """Plain-JAX f32 reference (lax.conv per candidate op) of the same forward pass."""
    x = jnp.transpose(x_nchw, (0, 2, 3, 1)).astype(jnp.float32)
    out = jnp.zeros(x.shape[:3] + (m.C_out,), jnp.float32)
    for i in m.active_index + m.inactive_index:
        prim = m.candidate[i]
        g = m.path_gate[i]
        if prim == "zero":
            continue
        elif prim == "skip_connect":
            out = out + g * x
        else:
            y = lax.conv_general_dilated(
                x, m.weights[prim], window_strides=(1, 1), padding="SAME",
                dimension_numbers=("NHWC", "HWIO", "NHWC"))
            out = out + g * y
    return jnp.transpose(out, (0, 3, 1, 2))


if __name__ == "__main__":
    key = jax.random.PRNGKey(0)
    k_x, k_mod = jax.random.split(key)

    N, C, Hs, Ws = 2, 4, 16, 16           # small NCHW input, C_in == C_out, stride 1
    x = jax.random.normal(k_x, (N, C, Hs, Ws), jnp.float32)

    mixed = MixedOp(C_in=C, C_out=C, stride=1, key=k_mod)

    out = jax.block_until_ready(mixed(x))
    ref = jax.block_until_ready(_reference_forward(mixed, x))

    assert out.shape == (N, C, Hs, Ws)
    max_err = float(jnp.max(jnp.abs(out - ref)))
    assert jnp.allclose(out, ref, atol=5e-2, rtol=5e-2), f"mismatch vs reference: {max_err}"

    print("KERNEL_OK")
</pallas_src>

<mosaic_0001>
module attributes {stable_mosaic.version = 11 : i64} {
  func.func @_mixed_matmul_kernel(%arg0: i32, %arg1: memref<512x128xbf16, #tpu.memory_space<vmem>>, %arg2: memref<128x128xbf16, #tpu.memory_space<vmem>>, %arg3: memref<512x128xbf16, #tpu.memory_space<vmem>>) attributes {dimension_semantics = [#tpu.dimension_semantics<parallel>], iteration_bounds = array<i64: 1>, scalar_prefetch = 0 : i64, scratch_operands = 0 : i64, tpu.core_type = #tpu.core_type<tc>, window_params = [{transform_indices = @transform_0, window_bounds = array<i64: 512, 128>}, {pipeline_mode = #tpu.pipeline_mode<synchronous>, transform_indices = @transform_1, window_bounds = array<i64: 128, 128>}, {transform_indices = @transform_2, window_bounds = array<i64: 512, 128>}]} {
    %c0 = arith.constant 0 : index
    %c0_0 = arith.constant 0 : index
    %0 = vector.load %arg1[%c0, %c0_0] : memref<512x128xbf16, #tpu.memory_space<vmem>>, vector<512x128xbf16>
    %c0_1 = arith.constant 0 : index
    %c0_2 = arith.constant 0 : index
    %1 = vector.load %arg2[%c0_1, %c0_2] : memref<128x128xbf16, #tpu.memory_space<vmem>>, vector<128x128xbf16>
    %cst = arith.constant dense<0.000000e+00> : vector<512x128xf32>
    %2 = tpu.matmul %0, %1, %cst {dimension_numbers = #tpu.dot_dimension_numbers<[1], [0], [0], [1], [0, 0, 1, 1], [], []>} : vector<512x128xbf16>, vector<128x128xbf16>, vector<512x128xf32> -> vector<512x128xf32>
    %3 = arith.truncf %2 : vector<512x128xf32> to vector<512x128xbf16>
    %c0_3 = arith.constant 0 : index
    %c0_4 = arith.constant 0 : index
    %4 = vector.load %arg3[%c0_3, %c0_4] : memref<512x128xbf16, #tpu.memory_space<vmem>>, vector<512x128xbf16>
    tpu.vector_store %arg3[%c0_3, %c0_4], %3 {strides = array<i32>} : memref<512x128xbf16, #tpu.memory_space<vmem>>, vector<512x128xbf16>,
    return
  }
  func.func @transform_0(%arg0: i32) -> (i32, i32) {
    %c0_i32 = arith.constant 0 : i32
    %c0_i32_0 = arith.constant 0 : i32
    return %arg0, %c0_i32 : i32, i32
  }
  func.func @transform_1(%arg0: i32) -> (i32, i32) {
    %c0_i32 = arith.constant 0 : i32
    %c0_i32_0 = arith.constant 0 : i32
    %c0_i32_1 = arith.constant 0 : i32
    return %c0_i32, %c0_i32_0 : i32, i32
  }
  func.func @transform_2(%arg0: i32) -> (i32, i32) {
    %c0_i32 = arith.constant 0 : i32
    %c0_i32_0 = arith.constant 0 : i32
    return %arg0, %c0_i32 : i32, i32
  }
}

</mosaic_0001>

<llo_original>
// kernel: _mixed_op_forward.1
$region0: #{_mixed_op_forward.1}
  #allocation0 [shape = 'u32[]', space=smem, size = 0x4, offset = 0x4, fixed_abs, tag = 'smem constant byte address 0x4 - core index']
  #allocation1 [shape = 'u32[144,128]{1,0:T(1,128)}', space=vmem, size = 0x12000, scoped, tag = 'internal scratch']
  %s0 = inlined_call_operand.vmem [shape: bf16[512,128], index: 0, kind: input, shape index: {}]
  %s1 = inlined_call_operand.vmem [shape: bf16[128,128], index: 1, kind: input, shape index: {}]
  %s2 = inlined_call_operand.vmem [shape: bf16[512,128], index: 2, kind: output, shape index: {}]
  %s3 = sld [smem:[#allocation0]]
  $region18: #{_mixed_op_forward.1} parent=0
    _
  %s5 = ssub.s32 1, %s3
  %s6 = scalar_select 0, %s5, %s3
  // Predicated region
  $region2: #{_mixed_op_forward.1} parent=0 // pred_check
    _
  $region3: #{_mixed_op_forward.1} parent=0 // pred_check_branch
    %8 = sbr.rel (0) target = $region5
  $region4: #{_mixed_op_forward.1} parent=0 // pred_region
    _
  $region5: #{_mixed_op_forward.1} parent=0 // pred_fallthru
    _
  // Predicated region
  $region6: #{_mixed_op_forward.1} parent=0 // pred_check
    _
  $region7: #{_mixed_op_forward.1} parent=0 // pred_check_branch
    %10 = sbr.rel (0) target = $region9
  $region8: #{_mixed_op_forward.1} parent=0 // pred_region
    _
  $region9: #{_mixed_op_forward.1} parent=0 // pred_fallthru
    _
  %v12 = vld [vmem:[%s0] sm:$0xf]
  %v13 = vld [vmem:[%s0 + $0x4] sm:$0xf]
  %v14 = vld [vmem:[%s0 + $0x8] sm:$0xf]
  %v15 = vld [vmem:[%s0 + $0xc] sm:$0xf]
  %v16 = vld [vmem:[%s0 + $0x10] sm:$0xf]
  %v17 = vld [vmem:[%s0 + $0x14] sm:$0xf]
  %v18 = vld [vmem:[%s0 + $0x18] sm:$0xf]
  %v19 = vld [vmem:[%s0 + $0x1c] sm:$0xf]
  %v20 = vld [vmem:[%s0 + $0x20] sm:$0xf]
  %v21 = vld [vmem:[%s0 + $0x24] sm:$0xf]
  %v22 = vld [vmem:[%s0 + $0x28] sm:$0xf]
  %v23 = vld [vmem:[%s0 + $0x2c] sm:$0xf]
  %v24 = vld [vmem:[%s0 + $0x30] sm:$0xf]
  %v25 = vld [vmem:[%s0 + $0x34] sm:$0xf]
  %v26 = vld [vmem:[%s0 + $0x38] sm:$0xf]
  %v27 = vld [vmem:[%s0 + $0x3c] sm:$0xf]
  %v28 = vld [vmem:[%s0 + $0x40] sm:$0xf]
  %v29 = vld [vmem:[%s0 + $0x44] sm:$0xf]
  %v30 = vld [vmem:[%s0 + $0x48] sm:$0xf]
  %v31 = vld [vmem:[%s0 + $0x4c] sm:$0xf]
  %v32 = vld [vmem:[%s0 + $0x50] sm:$0xf]
  %v33 = vld [vmem:[%s0 + $0x54] sm:$0xf]
  %v34 = vld [vmem:[%s0 + $0x58] sm:$0xf]
  %v35 = vld [vmem:[%s0 + $0x5c] sm:$0xf]
  %v36 = vld [vmem:[%s0 + $0x60] sm:$0xf]
  %v37 = vld [vmem:[%s0 + $0x64] sm:$0xf]
  %v38 = vld [vmem:[%s0 + $0x68] sm:$0xf]
  %v39 = vld [vmem:[%s0 + $0x6c] sm:$0xf]
  %v40 = vld [vmem:[%s0 + $0x70] sm:$0xf]
  %v41 = vld [vmem:[%s0 + $0x74] sm:$0xf]
  %v42 = vld [vmem:[%s0 + $0x78] sm:$0xf]
  %v43 = vld [vmem:[%s0 + $0x7c] sm:$0xf]
  %v44 = vld [vmem:[%s0 + $0x80] sm:$0xf]
  %v45 = vld [vmem:[%s0 + $0x84] sm:$0xf]
  %v46 = vld [vmem:[%s0 + $0x88] sm:$0xf]
  %v47 = vld [vmem:[%s0 + $0x8c] sm:$0xf]
  %v48 = vld [vmem:[%s0 + $0x90] sm:$0xf]
  %v49 = vld [vmem:[%s0 + $0x94] sm:$0xf]
  %v50 = vld [vmem:[%s0 + $0x98] sm:$0xf]
  %v51 = vld [vmem:[%s0 + $0x9c] sm:$0xf]
  %v52 = vld [vmem:[%s0 + $0xa0] sm:$0xf]
  %v53 = vld [vmem:[%s0 + $0xa4] sm:$0xf]
  %v54 = vld [vmem:[%s0 + $0xa8] sm:$0xf]
  %v55 = vld [vmem:[%s0 + $0xac] sm:$0xf]
  %v56 = vld [vmem:[%s0 + $0xb0] sm:$0xf]
  %v57 = vld [vmem:[%s0 + $0xb4] sm:$0xf]
  %v58 = vld [vmem:[%s0 + $0xb8] sm:$0xf]
  %v59 = vld [vmem:[%s0 + $0xbc] sm:$0xf]
  %v60 = vld [vmem:[%s0 + $0xc0] sm:$0xf]
  %v61 = vld [vmem:[%s0 + $0xc4] sm:$0xf]
  %v62 = vld [vmem:[%s0 + $0xc8] sm:$0xf]
  %v63 = vld [vmem:[%s0 + $0xcc] sm:$0xf]
  %v64 = vld [vmem:[%s0 + $0xd0] sm:$0xf]
  %v65 = vld [vmem:[%s0 + $0xd4] sm:$0xf]
  %v66 = vld [vmem:[%s0 + $0xd8] sm:$0xf]
  %v67 = vld [vmem:[%s0 + $0xdc] sm:$0xf]
  %v68 = vld [vmem:[%s0 + $0xe0] sm:$0xf]
  %v69 = vld [vmem:[%s0 + $0xe4] sm:$0xf]
  %v70 = vld [vmem:[%s0 + $0xe8] sm:$0xf]
  %v71 = vld [vmem:[%s0 + $0xec] sm:$0xf]
  %v72 = vld [vmem:[%s0 + $0xf0] sm:$0xf]
  %v73 = vld [vmem:[%s0 + $0xf4] sm:$0xf]
  %v74 = vld [vmem:[%s0 + $0xf8] sm:$0xf]
  %v75 = vld [vmem:[%s0 + $0xfc] sm:$0xf]
  %v76 = vld [vmem:[%s1] sm:$0xf]
  %v77 = vld [vmem:[%s1 + $0x4] sm:$0xf]
  %v78 = vld [vmem:[%s1 + $0x8] sm:$0xf]
  %v79 = vld [vmem:[%s1 + $0xc] sm:$0xf]
  %v80 = vld [vmem:[%s1 + $0x10] sm:$0xf]
  %v81 = vld [vmem:[%s1 + $0x14] sm:$0xf]
  %v82 = vld [vmem:[%s1 + $0x18] sm:$0xf]
  %v83 = vld [vmem:[%s1 + $0x1c] sm:$0xf]
  %v84 = vld [vmem:[%s1 + $0x20] sm:$0xf]
  %v85 = vld [vmem:[%s1 + $0x24] sm:$0xf]
  %v86 = vld [vmem:[%s1 + $0x28] sm:$0xf]
  %v87 = vld [vmem:[%s1 + $0x2c] sm:$0xf]
  %v88 = vld [vmem:[%s1 + $0x30] sm:$0xf]
  %v89 = vld [vmem:[%s1 + $0x34] sm:$0xf]
  %v90 = vld [vmem:[%s1 + $0x38] sm:$0xf]
  %v91 = vld [vmem:[%s1 + $0x3c] sm:$0xf]
  %v156 = vunpack.c.l.b16 %v12
  %v157 = vunpack.c.l.b16 %v13
  %v158 = vunpack.c.l.b16 %v14
  %v159 = vunpack.c.l.b16 %v15
  %v160 = vunpack.c.l.b16 %v16
  %v161 = vunpack.c.l.b16 %v17
  %v162 = vunpack.c.l.b16 %v18
  %v163 = vunpack.c.l.b16 %v19
  %v164 = vunpack.c.l.b16 %v20
  %v165 = vunpack.c.l.b16 %v21
  %v166 = vunpack.c.l.b16 %v22
  %v167 = vunpack.c.l.b16 %v23
  %v168 = vunpack.c.l.b16 %v24
  %v169 = vunpack.c.l.b16 %v25
  %v170 = vunpack.c.l.b16 %v26
  %v171 = vunpack.c.l.b16 %v27
  %v172 = vunpack.c.l.b16 %v28
  %v173 = vunpack.c.l.b16 %v29
  %v174 = vunpack.c.l.b16 %v30
  %v175 = vunpack.c.l.b16 %v31
  %v176 = vunpack.c.l.b16 %v32
  %v177 = vunpack.c.l.b16 %v33
  %v178 = vunpack.c.l.b16 %v34
  %v179 = vunpack.c.l.b16 %v35
  %v180 = vunpack.c.l.b16 %v36
  %v181 = vunpack.c.l.b16 %v37
  %v182 = vunpack.c.l.b16 %v38
  %v183 = vunpack.c.l.b16 %v39
  %v184 = vunpack.c.l.b16 %v40
  %v185 = vunpack.c.l.b16 %v41
  %v186 = vunpack.c.l.b16 %v42
  %v187 = vunpack.c.l.b16 %v43
  %v188 = vunpack.c.l.b16 %v44
  %v189 = vunpack.c.l.b16 %v45
  %v190 = vunpack.c.l.b16 %v46
  %v191 = vunpack.c.l.b16 %v47
  %v192 = vunpack.c.l.b16 %v48
  %v193 = vunpack.c.l.b16 %v49
  %v194 = vunpack.c.l.b16 %v50
  %v195 = vunpack.c.l.b16 %v51
  %v196 = vunpack.c.l.b16 %v52
  %v197 = vunpack.c.l.b16 %v53
  %v198 = vunpack.c.l.b16 %v54
  %v199 = vunpack.c.l.b16 %v55
  %v200 = vunpack.c.l.b16 %v56
  %v201 = vunpack.c.l.b16 %v57
  %v202 = vunpack.c.l.b16 %v58
  %v203 = vunpack.c.l.b16 %v59
  %v204 = vunpack.c.l.b16 %v60
  %v205 = vunpack.c.l.b16 %v61
  %v206 = vunpack.c.l.b16 %v62
  %v207 = vunpack.c.l.b16 %v63
  %v208 = vunpack.c.l.b16 %v64
  %v209 = vunpack.c.l.b16 %v65
  %v210 = vunpack.c.l.b16 %v66
  %v211 = vunpack.c.l.b16 %v67
  %v212 = vunpack.c.l.b16 %v68
  %v213 = vunpack.c.l.b16 %v69
  %v214 = vunpack.c.l.b16 %v70
  %v215 = vunpack.c.l.b16 %v71
  %v216 = vunpack.c.l.b16 %v72
  %v217 = vunpack.c.l.b16 %v73
  %v218 = vunpack.c.l.b16 %v74
  %v219 = vunpack.c.l.b16 %v75
  %v220 = vpack.c.b16 %v157, %v156
  %v221 = vpack.c.b16 %v159, %v158
  %v222 = vpack.c.b16 %v161, %v160
  %v223 = vpack.c.b16 %v163, %v162
  %v224 = vpack.c.b16 %v165, %v164
  %v225 = vpack.c.b16 %v167, %v166
  %v226 = vpack.c.b16 %v169, %v168
  %v227 = vpack.c.b16 %v171, %v170
  %v228 = vpack.c.b16 %v173, %v172
  %v229 = vpack.c.b16 %v175, %v174
  %v230 = vpack.c.b16 %v177, %v176
  %v231 = vpack.c.b16 %v179, %v178
  %v232 = vpack.c.b16 %v181, %v180
  %v233 = vpack.c.b16 %v183, %v182
  %v234 = vpack.c.b16 %v185, %v184
  %v235 = vpack.c.b16 %v187, %v186
  %v236 = vpack.c.b16 %v189, %v188
  %v237 = vpack.c.b16 %v191, %v190
  %v238 = vpack.c.b16 %v193, %v192
  %v239 = vpack.c.b16 %v195, %v194
  %v240 = vpack.c.b16 %v197, %v196
  %v241 = vpack.c.b16 %v199, %v198
  %v242 = vpack.c.b16 %v201, %v200
  %v243 = vpack.c.b16 %v203, %v202
  %v244 = vpack.c.b16 %v205, %v204
  %v245 = vpack.c.b16 %v207, %v206
  %v246 = vpack.c.b16 %v209, %v208
  %v247 = vpack.c.b16 %v211, %v210
  %v248 = vpack.c.b16 %v213, %v212
  %v249 = vpack.c.b16 %v215, %v214
  %v250 = vpack.c.b16 %v217, %v216
  %v251 = vpack.c.b16 %v219, %v218
  %v300 = vunpack.c.l.b16 %v76
  %v301 = vunpack.c.l.b16 %v77
  %v302 = vunpack.c.l.b16 %v78
  %v303 = vunpack.c.l.b16 %v79
  %v304 = vunpack.c.l.b16 %v80
  %v305 = vunpack.c.l.b16 %v81
  %v306 = vunpack.c.l.b16 %v82
  %v307 = vunpack.c.l.b16 %v83
  %v308 = vunpack.c.l.b16 %v84
  %v309 = vunpack.c.l.b16 %v85
  %v310 = vunpack.c.l.b16 %v86
  %v311 = vunpack.c.l.b16 %v87
  %v312 = vunpack.c.l.b16 %v88
  %v313 = vunpack.c.l.b16 %v89
  %v314 = vunpack.c.l.b16 %v90
  %v315 = vunpack.c.l.b16 %v91
  %v316 = vpack.c.b16 %v301, %v300
  %v317 = vpack.c.b16 %v303, %v302
  %v318 = vpack.c.b16 %v305, %v304
  %v319 = vpack.c.b16 %v307, %v306
  %v320 = vpack.c.b16 %v309, %v308
  %v321 = vpack.c.b16 %v311, %v310
  %v322 = vpack.c.b16 %v313, %v312
  %v323 = vpack.c.b16 %v315, %v314
  %332 = vmatprep.subr.bf16.mxu0 0
  %333 = vmatpush1.bf16.msra.mxu0 %v316
  %334 = vmatprep.subr.bf16.mxu0 0
  %335 = vmatpush1.bf16.msra.mxu0 %v317
  %336 = vmatprep.subr.bf16.mxu0 0
  %337 = vmatpush1.bf16.msra.mxu0 %v318
  %338 = vmatprep.subr.bf16.mxu0 0
  %339 = vmatpush1.bf16.msra.mxu0 %v319
  %340 = vmatprep.subr.bf16.mxu0 0
  %341 = vmatpush1.bf16.msra.mxu0 %v320
  %342 = vmatprep.subr.bf16.mxu0 0
  %343 = vmatpush1.bf16.msra.mxu0 %v321
  %344 = vmatprep.subr.bf16.mxu0 0
  %345 = vmatpush1.bf16.msra.mxu0 %v322
  %346 = vmatprep.subr.bf16.mxu0 0
  %347 = vmatpush1.bf16.msra.mxu0 %v323
  %348 = vmatprep.subr.bf16.mxu0 0
  %349 = vmatpush1.bf16.msra.mxu0 0
  %350 = vmatprep.subr.bf16.mxu0 0
  %351 = vmatpush1.bf16.msra.mxu0 0
  %352 = vmatprep.subr.bf16.mxu0 0
  %353 = vmatpush1.bf16.msra.mxu0 0
  %354 = vmatprep.subr.bf16.mxu0 0
  %355 = vmatpush1.bf16.msra.mxu0 0
  %356 = vmatprep.subr.bf16.mxu0 0
  %357 = vmatpush1.bf16.msra.mxu0 0
  %358 = vmatprep.subr.bf16.mxu0 0
  %359 = vmatpush1.bf16.msra.mxu0 0
  %360 = vmatprep.subr.bf16.mxu0 0
  %361 = vmatpush1.bf16.msra.mxu0 0
  %362 = vmatprep.subr.bf16.mxu0 0
  %363 = vmatpush1.bf16.msra.mxu0 0
  %364 = vmatprep.mubr.bf16.mxu0 0
  %365 = vmatmul.mubr.bf16.gmra.mrb[0].mxu0 %v220
  %v366 = vpop.f32.mrb[0].mxu0
  %v367 = vadd.f32 0.0, %v366
  %v368 = vpop.f32.mrb[0].mxu0
  %v369 = vpop.f32.mrb[0].mxu0
  %v370 = vadd.f32 0.0, %v369
  %v371 = vpop.f32.mrb[0].mxu0
  %372 = vmatprep.mubr.bf16.mxu0 0
  %373 = vmatmul.mubr.bf16.gmra.mrb[0].mxu0 %v221
  %v374 = vpop.f32.mrb[0].mxu0
  %v375 = vadd.f32 0.0, %v374
  %v376 = vpop.f32.mrb[0].mxu0
  %v377 = vpop.f32.mrb[0].mxu0
  %v378 = vadd.f32 0.0, %v377
  %v379 = vpop.f32.mrb[0].mxu0
  %380 = vmatprep.mubr.bf16.mxu0 0
  %381 = vmatmul.mubr.bf16.gmra.mrb[0].mxu0 %v222
  %v382 = vpop.f32.mrb[0].mxu0
  %v383 = vadd.f32 0.0, %v382
  %v384 = vpop.f32.mrb[0].mxu0
  %v385 = vpop.f32.mrb[0].mxu0
  %v386 = vadd.f32 0.0, %v385
  %v387 = vpop.f32.mrb[0].mxu0
  %388 = vmatprep.mubr.bf16.mxu0 0
  %389 = vmatmul.mubr.bf16.gmra.mrb[0].mxu0 %v223
  %v390 = vpop.f32.mrb[0].mxu0
  %v391 = vadd.f32 0.0, %v390
  %v392 = vpop.f32.mrb[0].mxu0
  %v393 = vpop.f32.mrb[0].mxu0
  %v394 = vadd.f32 0.0, %v393
  %v395 = vpop.f32.mrb[0].mxu0
  %396 = vmatprep.mubr.bf16.mxu0 0
  %397 = vmatmul.mubr.bf16.gmra.mrb[0].mxu0 %v224
  %v398 = vpop.f32.mrb[0].mxu0
  %v399 = vadd.f32 0.0, %v398
  %v400 = vpop.f32.mrb[0].mxu0
  %v401 = vpop.f32.mrb[0].mxu0
  %v402 = vadd.f32 0.0, %v401
  %v403 = vpop.f32.mrb[0].mxu0
  %404 = vmatprep.mubr.bf16.mxu0 0
  %405 = vmatmul.mubr.bf16.gmra.mrb[0].mxu0 %v225
  %v406 = vpop.f32.mrb[0].mxu0
  %v407 = vadd.f32 0.0, %v406
  %v408 = vpop.f32.mrb[0].mxu0
  %v409 = vpop.f32.mrb[0].mxu0
  %v410 = vadd.f32 0.0, %v409
  %v411 = vpop.f32.mrb[0].mxu0
  %412 = vmatprep.mubr.bf16.mxu0 0
  %413 = vmatmul.mubr.bf16.gmra.mrb[0].mxu0 %v226
  %v414 = vpop.f32.mrb[0].mxu0
  %v415 = vadd.f32 0.0, %v414
  %v416 = vpop.f32.mrb[0].mxu0
  %v417 = vpop.f32.mrb[0].mxu0
  %v418 = vadd.f32 0.0, %v417
  %v419 = vpop.f32.mrb[0].mxu0
  %420 = vmatprep.mubr.bf16.mxu0 0
  %421 = vmatmul.mubr.bf16.gmra.mrb[0].mxu0 %v227
  %v422 = vpop.f32.mrb[0].mxu0
  %v423 = vadd.f32 0.0, %v422
  %v424 = vpop.f32.mrb[0].mxu0
  %v425 = vpop.f32.mrb[0].mxu0
  %v426 = vadd.f32 0.0, %v425
  %v427 = vpop.f32.mrb[0].mxu0
  %428 = vmatprep.mubr.bf16.mxu0 0
  %429 = vmatmul.mubr.bf16.gmra.mrb[0].mxu0 %v228
  %v430 = vpop.f32.mrb[0].mxu0
  %v431 = vadd.f32 0.0, %v430
  %v432 = vpop.f32.mrb[0].mxu0
  %v433 = vpop.f32.mrb[0].mxu0
  %v434 = vadd.f32 0.0, %v433
  %v435 = vpop.f32.mrb[0].mxu0
  %436 = vmatprep.mubr.bf16.mxu0 0
  %437 = vmatmul.mubr.bf16.gmra.mrb[0].mxu0 %v229
  %v438 = vpop.f32.mrb[0].mxu0
  %v439 = vadd.f32 0.0, %v438
  %v440 = vpop.f32.mrb[0].mxu0
  %v441 = vpop.f32.mrb[0].mxu0
  %v442 = vadd.f32 0.0, %v441
  %v443 = vpop.f32.mrb[0].mxu0
  %444 = vmatprep.mubr.bf16.mxu0 0
  %445 = vmatmul.mubr.bf16.gmra.mrb[0].mxu0 %v230
  %v446 = vpop.f32.mrb[0].mxu0
  %v447 = vadd.f32 0.0, %v446
  %v448 = vpop.f32.mrb[0].mxu0
  %v449 = vpop.f32.mrb[0].mxu0
  %v450 = vadd.f32 0.0, %v449
  %v451 = vpop.f32.mrb[0].mxu0
  %452 = vmatprep.mubr.bf16.mxu0 0
  %453 = vmatmul.mubr.bf16.gmra.mrb[0].mxu0 %v231
  %v454 = vpop.f32.mrb[0].mxu0
  %v455 = vadd.f32 0.0, %v454
  %v456 = vpop.f32.mrb[0].mxu0
  %v457 = vpop.f32.mrb[0].mxu0
  %v458 = vadd.f32 0.0, %v457
  %v459 = vpop.f32.mrb[0].mxu0
  %460 = vmatprep.mubr.bf16.mxu0 0
  %461 = vmatmul.mubr.bf16.gmra.mrb[0].mxu0 %v232
  %v462 = vpop.f32.mrb[0].mxu0
  %v463 = vadd.f32 0.0, %v462
  %v464 = vpop.f32.mrb[0].mxu0
  %v465 = vpop.f32.mrb[0].mxu0
  %v466 = vadd.f32 0.0, %v465
  %v467 = vpop.f32.mrb[0].mxu0
  %468 = vmatprep.mubr.bf16.mxu0 0
  %469 = vmatmul.mubr.bf16.gmra.mrb[0].mxu0 %v233
  %v470 = vpop.f32.mrb[0].mxu0
  %v471 = vadd.f32 0.0, %v470
  %v472 = vpop.f32.mrb[0].mxu0
  %v473 = vpop.f32.mrb[0].mxu0
  %v474 = vadd.f32 0.0, %v473
  %v475 = vpop.f32.mrb[0].mxu0
  %476 = vmatprep.mubr.bf16.mxu0 0
  %477 = vmatmul.mubr.bf16.gmra.mrb[0].mxu0 %v234
  %v478 = vpop.f32.mrb[0].mxu0
  %v479 = vadd.f32 0.0, %v478
  %v480 = vpop.f32.mrb[0].mxu0
  %v481 = vpop.f32.mrb[0].mxu0
  %v482 = vadd.f32 0.0, %v481
  %v483 = vpop.f32.mrb[0].mxu0
  %484 = vmatprep.mubr.bf16.mxu0 0
  %485 = vmatmul.mubr.bf16.gmra.mrb[0].mxu0 %v235
  %v486 = vpop.f32.mrb[0].mxu0
  %v487 = vadd.f32 0.0, %v486
  %v488 = vpop.f32.mrb[0].mxu0
  %v489 = vpop.f32.mrb[0].mxu0
  %v490 = vadd.f32 0.0, %v489
  %v491 = vpop.f32.mrb[0].mxu0
  %492 = vmatprep.mubr.bf16.mxu0 0
  %493 = vmatmul.mubr.bf16.gmra.mrb[0].mxu0 %v236
  %v494 = vpop.f32.mrb[0].mxu0
  %v495 = vadd.f32 0.0, %v494
  %v496 = vpop.f32.mrb[0].mxu0
  %v497 = vpop.f32.mrb[0].mxu0
  %v498 = vadd.f32 0.0, %v497
  %v499 = vpop.f32.mrb[0].mxu0
  %500 = vmatprep.mubr.bf16.mxu0 0
  %501 = vmatmul.mubr.bf16.gmra.mrb[0].mxu0 %v237
  %v502 = vpop.f32.mrb[0].mxu0
  %v503 = vadd.f32 0.0, %v502
  %v504 = vpop.f32.mrb[0].mxu0
  %v505 = vpop.f32.mrb[0].mxu0
  %v506 = vadd.f32 0.0, %v505
  %v507 = vpop.f32.mrb[0].mxu0
  %508 = vmatprep.mubr.bf16.mxu0 0
  %509 = vmatmul.mubr.bf16.gmra.mrb[0].mxu0 %v238
  %v510 = vpop.f32.mrb[0].mxu0
  %v511 = vadd.f32 0.0, %v510
  %v512 = vpop.f32.mrb[0].mxu0
  %v513 = vpop.f32.mrb[0].mxu0
  %v514 = vadd.f32 0.0, %v513
  %v515 = vpop.f32.mrb[0].mxu0
  %516 = vmatprep.mubr.bf16.mxu0 0
  %517 = vmatmul.mubr.bf16.gmra.mrb[0].mxu0 %v239
  %v518 = vpop.f32.mrb[0].mxu0
  %v519 = vadd.f32 0.0, %v518
  %v520 = vpop.f32.mrb[0].mxu0
  %v521 = vpop.f32.mrb[0].mxu0
  %v522 = vadd.f32 0.0, %v521
  %v523 = vpop.f32.mrb[0].mxu0
  %524 = vmatprep.mubr.bf16.mxu0 0
  %525 = vmatmul.mubr.bf16.gmra.mrb[0].mxu0 %v240
  %v526 = vpop.f32.mrb[0].mxu0
  %v527 = vadd.f32 0.0, %v526
  %v528 = vpop.f32.mrb[0].mxu0
  %v529 = vpop.f32.mrb[0].mxu0
  %v530 = vadd.f32 0.0, %v529
  %v531 = vpop.f32.mrb[0].mxu0
  %532 = vmatprep.mubr.bf16.mxu0 0
  %533 = vmatmul.mubr.bf16.gmra.mrb[0].mxu0 %v241
  %v534 = vpop.f32.mrb[0].mxu0
  %v535 = vadd.f32 0.0, %v534
  %v536 = vpop.f32.mrb[0].mxu0
  %v537 = vpop.f32.mrb[0].mxu0
  %v538 = vadd.f32 0.0, %v537
  %v539 = vpop.f32.mrb[0].mxu0
  %540 = vmatprep.mubr.bf16.mxu0 0
  %541 = vmatmul.mubr.bf16.gmra.mrb[0].mxu0 %v242
  %v542 = vpop.f32.mrb[0].mxu0
  %v543 = vadd.f32 0.0, %v542
  %v544 = vpop.f32.mrb[0].mxu0
  %v545 = vpop.f32.mrb[0].mxu0
  %v546 = vadd.f32 0.0, %v545
  %v547 = vpop.f32.mrb[0].mxu0
  %548 = vmatprep.mubr.bf16.mxu0 0
  %549 = vmatmul.mubr.bf16.gmra.mrb[0].mxu0 %v243
  %v550 = vpop.f32.mrb[0].mxu0
  %v551 = vadd.f32 0.0, %v550
  %v552 = vpop.f32.mrb[0].mxu0
  %v553 = vpop.f32.mrb[0].mxu0
  %v554 = vadd.f32 0.0, %v553
  %v555 = vpop.f32.mrb[0].mxu0
  %556 = vmatprep.mubr.bf16.mxu0 0
  %557 = vmatmul.mubr.bf16.gmra.mrb[0].mxu0 %v244
  %v558 = vpop.f32.mrb[0].mxu0
  %v559 = vadd.f32 0.0, %v558
  %v560 = vpop.f32.mrb[0].mxu0
  %v561 = vpop.f32.mrb[0].mxu0
  %v562 = vadd.f32 0.0, %v561
  %v563 = vpop.f32.mrb[0].mxu0
  %564 = vmatprep.mubr.bf16.mxu0 0
  %565 = vmatmul.mubr.bf16.gmra.mrb[0].mxu0 %v245
  %v566 = vpop.f32.mrb[0].mxu0
  %v567 = vadd.f32 0.0, %v566
  %v568 = vpop.f32.mrb[0].mxu0
  %v569 = vpop.f32.mrb[0].mxu0
  %v570 = vadd.f32 0.0, %v569
  %v571 = vpop.f32.mrb[0].mxu0
  %572 = vmatprep.mubr.bf16.mxu0 0
  %573 = vmatmul.mubr.bf16.gmra.mrb[0].mxu0 %v246
  %v574 = vpop.f32.mrb[0].mxu0
  %v575 = vadd.f32 0.0, %v574
  %v576 = vpop.f32.mrb[0].mxu0
  %v577 = vpop.f32.mrb[0].mxu0
  %v578 = vadd.f32 0.0, %v577
  %v579 = vpop.f32.mrb[0].mxu0
  %580 = vmatprep.mubr.bf16.mxu0 0
  %581 = vmatmul.mubr.bf16.gmra.mrb[0].mxu0 %v247
  %v582 = vpop.f32.mrb[0].mxu0
  %v583 = vadd.f32 0.0, %v582
  %v584 = vpop.f32.mrb[0].mxu0
  %v585 = vpop.f32.mrb[0].mxu0
  %v586 = vadd.f32 0.0, %v585
  %v587 = vpop.f32.mrb[0].mxu0
  %588 = vmatprep.mubr.bf16.mxu0 0
  %589 = vmatmul.mubr.bf16.gmra.mrb[0].mxu0 %v248
  %v590 = vpop.f32.mrb[0].mxu0
  %v591 = vadd.f32 0.0, %v590
  %v592 = vpop.f32.mrb[0].mxu0
  %v593 = vpop.f32.mrb[0].mxu0
  %v594 = vadd.f32 0.0, %v593
  %v595 = vpop.f32.mrb[0].mxu0
  %596 = vmatprep.mubr.bf16.mxu0 0
  %597 = vmatmul.mubr.bf16.gmra.mrb[0].mxu0 %v249
  %v598 = vpop.f32.mrb[0].mxu0
  %v599 = vadd.f32 0.0, %v598
  %v600 = vpop.f32.mrb[0].mxu0
  %v601 = vpop.f32.mrb[0].mxu0
  %v602 = vadd.f32 0.0, %v601
  %v603 = vpop.f32.mrb[0].mxu0
  %604 = vmatprep.mubr.bf16.mxu0 0
  %605 = vmatmul.mubr.bf16.gmra.mrb[0].mxu0 %v250
  %v606 = vpop.f32.mrb[0].mxu0
  %v607 = vadd.f32 0.0, %v606
  %v608 = vpop.f32.mrb[0].mxu0
  %v609 = vpop.f32.mrb[0].mxu0
  %v610 = vadd.f32 0.0, %v609
  %v611 = vpop.f32.mrb[0].mxu0
  %612 = vmatprep.mubr.bf16.mxu0 0
  %613 = vmatmul.mubr.bf16.gmra.mrb[0].mxu0 %v251
  %v614 = vpop.f32.mrb[0].mxu0
  %v615 = vadd.f32 0.0, %v614
  %v616 = vpop.f32.mrb[0].mxu0
  %v617 = vpop.f32.mrb[0].mxu0
  %v618 = vadd.f32 0.0, %v617
  %v619 = vpop.f32.mrb[0].mxu0
  %620 = vdwg.mxu0
  %v621 = vpack.c.bf16 %v370, %v367
  %v622 = vpack.c.bf16 %v378, %v375
  %v623 = vpack.c.bf16 %v386, %v383
  %v624 = vpack.c.bf16 %v394, %v391
  %v625 = vpack.c.bf16 %v402, %v399
  %v626 = vpack.c.bf16 %v410, %v407
  %v627 = vpack.c.bf16 %v418, %v415
  %v628 = vpack.c.bf16 %v426, %v423
  %v629 = vpack.c.bf16 %v434, %v431
  %v630 = vpack.c.bf16 %v442, %v439
  %v631 = vpack.c.bf16 %v450, %v447
  %v632 = vpack.c.bf16 %v458, %v455
  %v633 = vpack.c.bf16 %v466, %v463
  %v634 = vpack.c.bf16 %v474, %v471
  %v635 = vpack.c.bf16 %v482, %v479
  %v636 = vpack.c.bf16 %v490, %v487
  %v637 = vpack.c.bf16 %v498, %v495
  %v638 = vpack.c.bf16 %v506, %v503
  %v639 = vpack.c.bf16 %v514, %v511
  %v640 = vpack.c.bf16 %v522, %v519
  %v641 = vpack.c.bf16 %v530, %v527
  %v642 = vpack.c.bf16 %v538, %v535
  %v643 = vpack.c.bf16 %v546, %v543
  %v644 = vpack.c.bf16 %v554, %v551
  %v645 = vpack.c.bf16 %v562, %v559
  %v646 = vpack.c.bf16 %v570, %v567
  %v647 = vpack.c.bf16 %v578, %v575
  %v648 = vpack.c.bf16 %v586, %v583
  %v649 = vpack.c.bf16 %v594, %v591
  %v650 = vpack.c.bf16 %v602, %v599
  %v651 = vpack.c.bf16 %v610, %v607
  %v652 = vpack.c.bf16 %v618, %v615
  %v685 = vunpack.c.l.b16 %v621
  %v686 = vunpack.c.h.b16 %v621
  %v687 = vunpack.c.l.b16 %v622
  %v688 = vunpack.c.h.b16 %v622
  %v689 = vunpack.c.l.b16 %v623
  %v690 = vunpack.c.h.b16 %v623
  %v691 = vunpack.c.l.b16 %v624
  %v692 = vunpack.c.h.b16 %v624
  %v693 = vunpack.c.l.b16 %v625
  %v694 = vunpack.c.h.b16 %v625
  %v695 = vunpack.c.l.b16 %v626
  %v696 = vunpack.c.h.b16 %v626
  %v697 = vunpack.c.l.b16 %v627
  %v698 = vunpack.c.h.b16 %v627
  %v699 = vunpack.c.l.b16 %v628
  %v700 = vunpack.c.h.b16 %v628
  %v701 = vunpack.c.l.b16 %v629
  %v702 = vunpack.c.h.b16 %v629
  %v703 = vunpack.c.l.b16 %v630
  %v704 = vunpack.c.h.b16 %v630
  %v705 = vunpack.c.l.b16 %v631
  %v706 = vunpack.c.h.b16 %v631
  %v707 = vunpack.c.l.b16 %v632
  %v708 = vunpack.c.h.b16 %v632
  %v709 = vunpack.c.l.b16 %v633
  %v710 = vunpack.c.h.b16 %v633
  %v711 = vunpack.c.l.b16 %v634
  %v712 = vunpack.c.h.b16 %v634
  %v713 = vunpack.c.l.b16 %v635
  %v714 = vunpack.c.h.b16 %v635
  %v715 = vunpack.c.l.b16 %v636
  %v716 = vunpack.c.h.b16 %v636
  %v717 = vunpack.c.l.b16 %v637
  %v718 = vunpack.c.h.b16 %v637
  %v719 = vunpack.c.l.b16 %v638
  %v720 = vunpack.c.h.b16 %v638
  %v721 = vunpack.c.l.b16 %v639
  %v722 = vunpack.c.h.b16 %v639
  %v723 = vunpack.c.l.b16 %v640
  %v724 = vunpack.c.h.b16 %v640
  %v725 = vunpack.c.l.b16 %v641
  %v726 = vunpack.c.h.b16 %v641
  %v727 = vunpack.c.l.b16 %v642
  %v728 = vunpack.c.h.b16 %v642
  %v729 = vunpack.c.l.b16 %v643
  %v730 = vunpack.c.h.b16 %v643
  %v731 = vunpack.c.l.b16 %v644
  %v732 = vunpack.c.h.b16 %v644
  %v733 = vunpack.c.l.b16 %v645
  %v734 = vunpack.c.h.b16 %v645
  %v735 = vunpack.c.l.b16 %v646
  %v736 = vunpack.c.h.b16 %v646
  %v737 = vunpack.c.l.b16 %v647
  %v738 = vunpack.c.h.b16 %v647
  %v739 = vunpack.c.l.b16 %v648
  %v740 = vunpack.c.h.b16 %v648
  %v741 = vunpack.c.l.b16 %v649
  %v742 = vunpack.c.h.b16 %v649
  %v743 = vunpack.c.l.b16 %v650
  %v744 = vunpack.c.h.b16 %v650
  %v745 = vunpack.c.l.b16 %v651
  %v746 = vunpack.c.h.b16 %v651
  %v747 = vunpack.c.l.b16 %v652
  %v748 = vunpack.c.h.b16 %v652
  %v749 = vpack.c.b16 %v685, %v685
  %v750 = vpack.c.b16 %v686, %v686
  %v751 = vpack.c.b16 %v687, %v687
  %v752 = vpack.c.b16 %v688, %v688
  %v753 = vpack.c.b16 %v689, %v689
  %v754 = vpack.c.b16 %v690, %v690
  %v755 = vpack.c.b16 %v691, %v691
  %v756 = vpack.c.b16 %v692, %v692
  %v757 = vpack.c.b16 %v693, %v693
  %v758 = vpack.c.b16 %v694, %v694
  %v759 = vpack.c.b16 %v695, %v695
  %v760 = vpack.c.b16 %v696, %v696
  %v761 = vpack.c.b16 %v697, %v697
  %v762 = vpack.c.b16 %v698, %v698
  %v763 = vpack.c.b16 %v699, %v699
  %v764 = vpack.c.b16 %v700, %v700
  %v765 = vpack.c.b16 %v701, %v701
  %v766 = vpack.c.b16 %v702, %v702
  %v767 = vpack.c.b16 %v703, %v703
  %v768 = vpack.c.b16 %v704, %v704
  %v769 = vpack.c.b16 %v705, %v705
  %v770 = vpack.c.b16 %v706, %v706
  %v771 = vpack.c.b16 %v707, %v707
  %v772 = vpack.c.b16 %v708, %v708
  %v773 = vpack.c.b16 %v709, %v709
  %v774 = vpack.c.b16 %v710, %v710
  %v775 = vpack.c.b16 %v711, %v711
  %v776 = vpack.c.b16 %v712, %v712
  %v777 = vpack.c.b16 %v713, %v713
  %v778 = vpack.c.b16 %v714, %v714
  %v779 = vpack.c.b16 %v715, %v715
  %v780 = vpack.c.b16 %v716, %v716
  %v781 = vpack.c.b16 %v717, %v717
  %v782 = vpack.c.b16 %v718, %v718
  %v783 = vpack.c.b16 %v719, %v719
  %v784 = vpack.c.b16 %v720, %v720
  %v785 = vpack.c.b16 %v721, %v721
  %v786 = vpack.c.b16 %v722, %v722
  %v787 = vpack.c.b16 %v723, %v723
  %v788 = vpack.c.b16 %v724, %v724
  %v789 = vpack.c.b16 %v725, %v725
  %v790 = vpack.c.b16 %v726, %v726
  %v791 = vpack.c.b16 %v727, %v727
  %v792 = vpack.c.b16 %v728, %v728
  %v793 = vpack.c.b16 %v729, %v729
  %v794 = vpack.c.b16 %v730, %v730
  %v795 = vpack.c.b16 %v731, %v731
  %v796 = vpack.c.b16 %v732, %v732
  %v797 = vpack.c.b16 %v733, %v733
  %v798 = vpack.c.b16 %v734, %v734
  %v799 = vpack.c.b16 %v735, %v735
  %v800 = vpack.c.b16 %v736, %v736
  %v801 = vpack.c.b16 %v737, %v737
  %v802 = vpack.c.b16 %v738, %v738
  %v803 = vpack.c.b16 %v739, %v739
  %v804 = vpack.c.b16 %v740, %v740
  %v805 = vpack.c.b16 %v741, %v741
  %v806 = vpack.c.b16 %v742, %v742
  %v807 = vpack.c.b16 %v743, %v743
  %v808 = vpack.c.b16 %v744, %v744
  %v809 = vpack.c.b16 %v745, %v745
  %v810 = vpack.c.b16 %v746, %v746
  %v811 = vpack.c.b16 %v747, %v747
  %v812 = vpack.c.b16 %v748, %v748
  %877 = vst [vmem:[%s2] sm:$0xf] %v749
  %878 = vst [vmem:[%s2 + $0x4] sm:$0xf] %v750
  %879 = vst [vmem:[%s2 + $0x8] sm:$0xf] %v751
  %880 = vst [vmem:[%s2 + $0xc] sm:$0xf] %v752
  %881 = vst [vmem:[%s2 + $0x10] sm:$0xf] %v753
  %882 = vst [vmem:[%s2 + $0x14] sm:$0xf] %v754
  %883 = vst [vmem:[%s2 + $0x18] sm:$0xf] %v755
  %884 = vst [vmem:[%s2 + $0x1c] sm:$0xf] %v756
  %885 = vst [vmem:[%s2 + $0x20] sm:$0xf] %v757
  %886 = vst [vmem:[%s2 + $0x24] sm:$0xf] %v758
  %887 = vst [vmem:[%s2 + $0x28] sm:$0xf] %v759
  %888 = vst [vmem:[%s2 + $0x2c] sm:$0xf] %v760
  %889 = vst [vmem:[%s2 + $0x30] sm:$0xf] %v761
  %890 = vst [vmem:[%s2 + $0x34] sm:$0xf] %v762
  %891 = vst [vmem:[%s2 + $0x38] sm:$0xf] %v763
  %892 = vst [vmem:[%s2 + $0x3c] sm:$0xf] %v764
  %893 = vst [vmem:[%s2 + $0x40] sm:$0xf] %v765
  %894 = vst [vmem:[%s2 + $0x44] sm:$0xf] %v766
  %895 = vst [vmem:[%s2 + $0x48] sm:$0xf] %v767
  %896 = vst [vmem:[%s2 + $0x4c] sm:$0xf] %v768
  %897 = vst [vmem:[%s2 + $0x50] sm:$0xf] %v769
  %898 = vst [vmem:[%s2 + $0x54] sm:$0xf] %v770
  %899 = vst [vmem:[%s2 + $0x58] sm:$0xf] %v771
  %900 = vst [vmem:[%s2 + $0x5c] sm:$0xf] %v772
  %901 = vst [vmem:[%s2 + $0x60] sm:$0xf] %v773
  %902 = vst [vmem:[%s2 + $0x64] sm:$0xf] %v774
  %903 = vst [vmem:[%s2 + $0x68] sm:$0xf] %v775
  %904 = vst [vmem:[%s2 + $0x6c] sm:$0xf] %v776
  %905 = vst [vmem:[%s2 + $0x70] sm:$0xf] %v777
  %906 = vst [vmem:[%s2 + $0x74] sm:$0xf] %v778
  %907 = vst [vmem:[%s2 + $0x78] sm:$0xf] %v779
  %908 = vst [vmem:[%s2 + $0x7c] sm:$0xf] %v780
  %909 = vst [vmem:[%s2 + $0x80] sm:$0xf] %v781
  %910 = vst [vmem:[%s2 + $0x84] sm:$0xf] %v782
  %911 = vst [vmem:[%s2 + $0x88] sm:$0xf] %v783
  %912 = vst [vmem:[%s2 + $0x8c] sm:$0xf] %v784
  %913 = vst [vmem:[%s2 + $0x90] sm:$0xf] %v785
  %914 = vst [vmem:[%s2 + $0x94] sm:$0xf] %v786
  %915 = vst [vmem:[%s2 + $0x98] sm:$0xf] %v787
  %916 = vst [vmem:[%s2 + $0x9c] sm:$0xf] %v788
  %917 = vst [vmem:[%s2 + $0xa0] sm:$0xf] %v789
  %918 = vst [vmem:[%s2 + $0xa4] sm:$0xf] %v790
  %919 = vst [vmem:[%s2 + $0xa8] sm:$0xf] %v791
  %920 = vst [vmem:[%s2 + $0xac] sm:$0xf] %v792
  %921 = vst [vmem:[%s2 + $0xb0] sm:$0xf] %v793
  %922 = vst [vmem:[%s2 + $0xb4] sm:$0xf] %v794
  %923 = vst [vmem:[%s2 + $0xb8] sm:$0xf] %v795
  %924 = vst [vmem:[%s2 + $0xbc] sm:$0xf] %v796
  %925 = vst [vmem:[%s2 + $0xc0] sm:$0xf] %v797
  %926 = vst [vmem:[%s2 + $0xc4] sm:$0xf] %v798
  %927 = vst [vmem:[%s2 + $0xc8] sm:$0xf] %v799
  %928 = vst [vmem:[%s2 + $0xcc] sm:$0xf] %v800
  %929 = vst [vmem:[%s2 + $0xd0] sm:$0xf] %v801
  %930 = vst [vmem:[%s2 + $0xd4] sm:$0xf] %v802
  %931 = vst [vmem:[%s2 + $0xd8] sm:$0xf] %v803
  %932 = vst [vmem:[%s2 + $0xdc] sm:$0xf] %v804
  %933 = vst [vmem:[%s2 + $0xe0] sm:$0xf] %v805
  %934 = vst [vmem:[%s2 + $0xe4] sm:$0xf] %v806
  %935 = vst [vmem:[%s2 + $0xe8] sm:$0xf] %v807
  %936 = vst [vmem:[%s2 + $0xec] sm:$0xf] %v808
  %937 = vst [vmem:[%s2 + $0xf0] sm:$0xf] %v809
  %938 = vst [vmem:[%s2 + $0xf4] sm:$0xf] %v810
  %939 = vst [vmem:[%s2 + $0xf8] sm:$0xf] %v811
  %940 = vst [vmem:[%s2 + $0xfc] sm:$0xf] %v812
  // Predicated region
  $region10: #{_mixed_op_forward.1} parent=0 // pred_check
    _
  $region11: #{_mixed_op_forward.1} parent=0 // pred_check_branch
    %942 = sbr.rel (0) target = $region13
  $region12: #{_mixed_op_forward.1} parent=0 // pred_region
    _
  $region13: #{_mixed_op_forward.1} parent=0 // pred_fallthru
    _
  // Predicated region
  $region14: #{_mixed_op_forward.1} parent=0 // pred_check
    _
  $region15: #{_mixed_op_forward.1} parent=0 // pred_check_branch
    %944 = sbr.rel (0) target = $region17
  $region16: #{_mixed_op_forward.1} parent=0 // pred_region
    _
  $region17: #{_mixed_op_forward.1} parent=0 // pred_fallthru
    _

</llo_original>
